<compile_context>
chip_gen: v7x
topology: tpu7x:2x2x1
jax: 0.10.0
libtpu: 0.0.40
codegen_flags: <defaults>
</compile_context>

<pallas_src>
import jax
import jax.numpy as jnp
from jax.experimental import pallas as pl
from jax.experimental.pallas import tpu as pltpu

PACK = 128  # lane-dense packing width for fused heads (H*MID = 96 <= 128)


def _fused_heads_kernel(x_ref, w1_ref, b1_ref, w2_ref, b2_ref, t_ref, o_ref):
    # All heads fused: one ReLU, one (tn,64)@(64,128) matmul, one ReLU,
    # one (tn,128)@(128,128) block-diagonal matmul.  Both stores are
    # 128-lane dense (unmasked).
    h = jnp.maximum(x_ref[...], 0.0)                                        # ReLU(x), once
    t = jnp.dot(h, w1_ref[...],
                preferred_element_type=jnp.float32) + b1_ref[...]           # (tn, 128)
    t_ref[...] = t                                                          # packed out_temp of all heads
    h2 = jnp.maximum(t, 0.0)                                                # ReLU (pad lanes stay 0)
    o_ref[...] = jnp.dot(h2, w2_ref[...],
                         preferred_element_type=jnp.float32) + b2_ref[...]  # (tn, 128)


def hgcpep_forward(x, A, packed, draw_class, max_tile_n=1024):
    """x: (N, 64) float32.  A: unused (latterPart == 'nothing').
    packed: dict from pack_params() with lane-packed head weights.
    Returns (outs_list, out_embedding) matching the PyTorch module."""
    del A  # forward ignores A for latterPart == 'nothing'
    N, F = x.shape
    H, MID, OUT = packed["H"], packed["mid"], packed["out"]

    # Tile the N axis only if it is large; for small N a single block is used.
    tn = N if N <= max_tile_n else max_tile_n
    grid = (pl.cdiv(N, tn),)

    t_out, o_out = pl.pallas_call(
        _fused_heads_kernel,
        out_shape=(
            jax.ShapeDtypeStruct((N, PACK), jnp.float32),   # packed layer-1 activations
            jax.ShapeDtypeStruct((N, PACK), jnp.float32),   # packed head logits
        ),
        grid_spec=pltpu.PrefetchScalarGridSpec(
            num_scalar_prefetch=0,
            grid=grid,
            in_specs=[
                pl.BlockSpec((tn, F), lambda i: (i, 0)),        # x tile
                pl.BlockSpec((F, PACK), lambda i: (0, 0)),      # fused W1
                pl.BlockSpec((1, PACK), lambda i: (0, 0)),      # fused b1
                pl.BlockSpec((PACK, PACK), lambda i: (0, 0)),   # block-diag W2
                pl.BlockSpec((1, PACK), lambda i: (0, 0)),      # fused b2
            ],
            out_specs=[
                pl.BlockSpec((tn, PACK), lambda i: (i, 0)),
                pl.BlockSpec((tn, PACK), lambda i: (i, 0)),
            ],
        ),
        compiler_params=pltpu.CompilerParams(
            dimension_semantics=("parallel",)),                 # independent N tiles
    )(x, packed["w1p"], packed["b1p"], packed["w2p"], packed["b2p"])

    outs = [o_out[:, h * OUT:(h + 1) * OUT] for h in range(H)]
    out_embedding = t_out[:, draw_class * MID:(draw_class + 1) * MID]
    return outs, out_embedding


def init_params(key, num_heads, in_dim=64, mid_dim=32, out_dim=2):
    """Deterministic synthetic init, PyTorch nn.Linear convention W:(out,in)."""
    keys = jax.random.split(key, 4 * num_heads)
    heads = []
    for i in range(num_heads):
        k1, k2, k3, k4 = keys[4 * i: 4 * i + 4]
        heads.append({
            "w1": jax.random.uniform(k1, (mid_dim, in_dim), jnp.float32, -0.1, 0.1),
            "b1": jax.random.uniform(k2, (mid_dim,), jnp.float32, -0.1, 0.1),
            "w2": jax.random.uniform(k3, (out_dim, mid_dim), jnp.float32, -0.1, 0.1),
            "b2": jax.random.uniform(k4, (out_dim,), jnp.float32, -0.1, 0.1),
        })
    return heads


def pack_params(heads, pack=PACK):
    """Pack per-head PyTorch-layout weights into lane-dense fused matrices.
    W1: concat along lanes -> (in_dim, pack);  W2: block-diagonal -> (pack, pack)."""
    H = len(heads)
    mid, in_dim = heads[0]["w1"].shape
    out = heads[0]["w2"].shape[0]
    assert H * mid <= pack and H * out <= pack
    w1p = jnp.zeros((in_dim, pack), jnp.float32)
    b1p = jnp.zeros((1, pack), jnp.float32)
    w2p = jnp.zeros((pack, pack), jnp.float32)
    b2p = jnp.zeros((1, pack), jnp.float32)
    for h, p in enumerate(heads):
        w1p = w1p.at[:, h * mid:(h + 1) * mid].set(p["w1"].T)
        b1p = b1p.at[0, h * mid:(h + 1) * mid].set(p["b1"])
        w2p = w2p.at[h * mid:(h + 1) * mid, h * out:(h + 1) * out].set(p["w2"].T)
        b2p = b2p.at[0, h * out:(h + 1) * out].set(p["b2"])
    return {"w1p": w1p, "b1p": b1p, "w2p": w2p, "b2p": b2p,
            "H": H, "mid": mid, "out": out}


def reference_forward(x, heads, draw_class):
    """Pure-JAX reference mirroring the PyTorch forward (per-head loop)."""
    rep = x.reshape(x.shape[0], -1)
    outs, emb = [], None
    for i, p in enumerate(heads):
        t = jnp.maximum(rep, 0.0) @ p["w1"].T + p["b1"]      # Sequential(ReLU, Linear(64,32))
        o = jnp.maximum(t, 0.0) @ p["w2"].T + p["b2"]        # Sequential(ReLU, Linear(32,2))
        if i == draw_class:
            emb = t
        outs.append(o)
    return outs, emb


if __name__ == "__main__":
    key = jax.random.PRNGKey(0)
    kx, ka, kp = jax.random.split(key, 3)

    N, IN_DIM = 8, 64            # representation.reshape(N, -1) gives 64 features
    NUM_CLASSES = 3              # config['class_num'] = 3
    DRAW_CLASS = 1               # config['draw_data']['draw_class'] = 1

    x = jax.random.normal(kx, (N, IN_DIM), dtype=jnp.float32)
    A = jax.random.normal(ka, (N, N), dtype=jnp.float32)   # unused (latterPart='nothing')
    heads = init_params(kp, NUM_CLASSES, in_dim=IN_DIM)
    packed = pack_params(heads)

    outs, out_embedding = hgcpep_forward(x, A, packed, DRAW_CLASS)
    jax.block_until_ready(out_embedding)
    for o in outs:
        jax.block_until_ready(o)

    # correctness check against a pure-JAX reference
    ref_outs, ref_emb = reference_forward(x, heads, DRAW_CLASS)
    for o, ro in zip(outs, ref_outs):
        assert jnp.allclose(o, ro, atol=1e-5), "head output mismatch"
    assert jnp.allclose(out_embedding, ref_emb, atol=1e-5), "embedding mismatch"

    print("KERNEL_OK")
</pallas_src>

<mosaic_0001>
module attributes {stable_mosaic.version = 11 : i64} {
  func.func @_fused_heads_kernel(%arg0: i32, %arg1: memref<8x64xf32, #tpu.memory_space<vmem>>, %arg2: memref<64x128xf32, #tpu.memory_space<vmem>>, %arg3: memref<1x128xf32, #tpu.memory_space<vmem>>, %arg4: memref<128x128xf32, #tpu.memory_space<vmem>>, %arg5: memref<1x128xf32, #tpu.memory_space<vmem>>, %arg6: memref<8x128xf32, #tpu.memory_space<vmem>>, %arg7: memref<8x128xf32, #tpu.memory_space<vmem>>) attributes {dimension_semantics = [#tpu.dimension_semantics<parallel>], iteration_bounds = array<i64: 1>, scalar_prefetch = 0 : i64, scratch_operands = 0 : i64, tpu.core_type = #tpu.core_type<tc>, window_params = [{transform_indices = @transform_0, window_bounds = array<i64: 8, 64>}, {pipeline_mode = #tpu.pipeline_mode<synchronous>, transform_indices = @transform_1, window_bounds = array<i64: 64, 128>}, {pipeline_mode = #tpu.pipeline_mode<synchronous>, transform_indices = @transform_2, window_bounds = array<i64: 1, 128>}, {pipeline_mode = #tpu.pipeline_mode<synchronous>, transform_indices = @transform_3, window_bounds = array<i64: 128, 128>}, {pipeline_mode = #tpu.pipeline_mode<synchronous>, transform_indices = @transform_4, window_bounds = array<i64: 1, 128>}, {transform_indices = @transform_5, window_bounds = array<i64: 8, 128>}, {transform_indices = @transform_6, window_bounds = array<i64: 8, 128>}]} {
    %c0 = arith.constant 0 : index
    %c0_0 = arith.constant 0 : index
    %0 = vector.load %arg1[%c0, %c0_0] : memref<8x64xf32, #tpu.memory_space<vmem>>, vector<8x64xf32>
    %cst = arith.constant 0.000000e+00 : f32
    %1 = vector.broadcast %cst : f32 to vector<8x64xf32>
    %2 = arith.maximumf %0, %1 : vector<8x64xf32>
    %c0_1 = arith.constant 0 : index
    %c0_2 = arith.constant 0 : index
    %3 = vector.load %arg2[%c0_1, %c0_2] : memref<64x128xf32, #tpu.memory_space<vmem>>, vector<64x128xf32>
    %cst_3 = arith.constant dense<0.000000e+00> : vector<8x128xf32>
    %4 = tpu.matmul %2, %3, %cst_3 {dimension_numbers = #tpu.dot_dimension_numbers<[1], [0], [0], [1], [0, 0, 1, 1], [], []>} : vector<8x64xf32>, vector<64x128xf32>, vector<8x128xf32> -> vector<8x128xf32>
    %c0_4 = arith.constant 0 : index
    %c0_5 = arith.constant 0 : index
    %5 = vector.load %arg3[%c0_4, %c0_5] : memref<1x128xf32, #tpu.memory_space<vmem>>, vector<1x128xf32>
    %6 = vector.broadcast %5 : vector<1x128xf32> to vector<8x128xf32>
    %7 = arith.addf %4, %6 : vector<8x128xf32>
    %c0_6 = arith.constant 0 : index
    %c0_7 = arith.constant 0 : index
    %8 = vector.load %arg6[%c0_6, %c0_7] : memref<8x128xf32, #tpu.memory_space<vmem>>, vector<8x128xf32>
    tpu.vector_store %arg6[%c0_6, %c0_7], %7 {strides = array<i32>} : memref<8x128xf32, #tpu.memory_space<vmem>>, vector<8x128xf32>,
    %cst_8 = arith.constant 0.000000e+00 : f32
    %9 = vector.broadcast %cst_8 : f32 to vector<8x128xf32>
    %10 = arith.maximumf %7, %9 : vector<8x128xf32>
    %c0_9 = arith.constant 0 : index
    %c0_10 = arith.constant 0 : index
    %11 = vector.load %arg4[%c0_9, %c0_10] : memref<128x128xf32, #tpu.memory_space<vmem>>, vector<128x128xf32>
    %cst_11 = arith.constant dense<0.000000e+00> : vector<8x128xf32>
    %12 = tpu.matmul %10, %11, %cst_11 {dimension_numbers = #tpu.dot_dimension_numbers<[1], [0], [0], [1], [0, 0, 1, 1], [], []>} : vector<8x128xf32>, vector<128x128xf32>, vector<8x128xf32> -> vector<8x128xf32>
    %c0_12 = arith.constant 0 : index
    %c0_13 = arith.constant 0 : index
    %13 = vector.load %arg5[%c0_12, %c0_13] : memref<1x128xf32, #tpu.memory_space<vmem>>, vector<1x128xf32>
    %14 = vector.broadcast %13 : vector<1x128xf32> to vector<8x128xf32>
    %15 = arith.addf %12, %14 : vector<8x128xf32>
    %c0_14 = arith.constant 0 : index
    %c0_15 = arith.constant 0 : index
    %16 = vector.load %arg7[%c0_14, %c0_15] : memref<8x128xf32, #tpu.memory_space<vmem>>, vector<8x128xf32>
    tpu.vector_store %arg7[%c0_14, %c0_15], %15 {strides = array<i32>} : memref<8x128xf32, #tpu.memory_space<vmem>>, vector<8x128xf32>,
    return
  }
  func.func @transform_0(%arg0: i32) -> (i32, i32) {
    %c0_i32 = arith.constant 0 : i32
    %c0_i32_0 = arith.constant 0 : i32
    return %arg0, %c0_i32 : i32, i32
  }
  func.func @transform_1(%arg0: i32) -> (i32, i32) {
    %c0_i32 = arith.constant 0 : i32
    %c0_i32_0 = arith.constant 0 : i32
    %c0_i32_1 = arith.constant 0 : i32
    return %c0_i32, %c0_i32_0 : i32, i32
  }
  func.func @transform_2(%arg0: i32) -> (i32, i32) {
    %c0_i32 = arith.constant 0 : i32
    %c0_i32_0 = arith.constant 0 : i32
    %c0_i32_1 = arith.constant 0 : i32
    return %c0_i32, %c0_i32_0 : i32, i32
  }
  func.func @transform_3(%arg0: i32) -> (i32, i32) {
    %c0_i32 = arith.constant 0 : i32
    %c0_i32_0 = arith.constant 0 : i32
    %c0_i32_1 = arith.constant 0 : i32
    return %c0_i32, %c0_i32_0 : i32, i32
  }
  func.func @transform_4(%arg0: i32) -> (i32, i32) {
    %c0_i32 = arith.constant 0 : i32
    %c0_i32_0 = arith.constant 0 : i32
    %c0_i32_1 = arith.constant 0 : i32
    return %c0_i32, %c0_i32_0 : i32, i32
  }
  func.func @transform_5(%arg0: i32) -> (i32, i32) {
    %c0_i32 = arith.constant 0 : i32
    %c0_i32_0 = arith.constant 0 : i32
    return %arg0, %c0_i32 : i32, i32
  }
  func.func @transform_6(%arg0: i32) -> (i32, i32) {
    %c0_i32 = arith.constant 0 : i32
    %c0_i32_0 = arith.constant 0 : i32
    return %arg0, %c0_i32 : i32, i32
  }
}

</mosaic_0001>

<llo_original>
// kernel: tpu_custom_call.1
$region0: #{tpu_custom_call.1}
  #allocation0 [shape = 'u32[]', space=smem, size = 0x4, offset = 0x4, fixed_abs, tag = 'smem constant byte address 0x4 - core index']
  #allocation1 [shape = 'u32[144,128]{1,0:T(1,128)}', space=vmem, size = 0x12000, scoped, tag = 'internal scratch']
  %s0 = inlined_call_operand.hbm [shape: f32[8,64], index: 0, kind: input, shape index: {}]
  %s1 = inlined_call_operand.hbm [shape: f32[64,128], index: 1, kind: input, shape index: {}]
  %s2 = inlined_call_operand.vmem [shape: f32[1,128], index: 2, kind: input, shape index: {}]
  %s3 = inlined_call_operand.hbm [shape: f32[128,128], index: 3, kind: input, shape index: {}]
  %s4 = inlined_call_operand.vmem [shape: f32[1,128], index: 4, kind: input, shape index: {}]
  %s5 = inlined_call_operand.hbm [shape: f32[8,128], index: 5, kind: output, shape index: {0}]
  %s6 = inlined_call_operand.hbm [shape: f32[8,128], index: 6, kind: output, shape index: {1}]
  %7 = xla_tuple %s5, %s6
  %s8 = sld [smem:[#allocation0]]
  $region50: #{tpu_custom_call.1} parent=0
    _
  %s10 = ssub.s32 1, %s8
  %s11 = scalar_select 0, %s10, %s8
  $region1: #{tpu_custom_call.1} parent=0
    #allocation2 [shape = 'u8[4096]{0}', space=vmem, size = 0x1000, scoped, tag = 'input window, operand 0, single buffered']
    #allocation3 [shape = 's32[1]{0}', space=sflag, size = 0x4, scoped, tag = 'scoped memory for tpu_custom_call.1']
    #allocation4 [shape = 's32[1]{0}', space=sflag, size = 0x4, scoped, tag = 'scoped memory for tpu_custom_call.1']
    #allocation5 [shape = 'u8[32768]{0}', space=vmem, size = 0x8000, scoped, tag = 'input window, operand 1, single buffered']
    #allocation6 [shape = 's32[1]{0}', space=sflag, size = 0x4, scoped, tag = 'scoped memory for tpu_custom_call.1']
    #allocation7 [shape = 'u8[65536]{0}', space=vmem, size = 0x10000, scoped, tag = 'input window, operand 3, single buffered']
    #allocation8 [shape = 'u8[4096]{0}', space=vmem, size = 0x1000, scoped, tag = 'output window, operand 0, single buffered']
    #allocation9 [shape = 'u8[4096]{0}', space=vmem, size = 0x1000, scoped, tag = 'output window, operand 1, single buffered']
    #allocation10 [shape = 's32[1]{0}', space=sflag, size = 0x4, scoped, tag = 'scoped memory for tpu_custom_call.1']
    %12 = vsyncpa [#allocation3], 0
    %13 = vsyncpa [#allocation6], 0
    %14 = vsyncpa [#allocation4], 0
    %15 = vsyncpa [#allocation10], 0
    // Predicated region
    $region2: #{tpu_custom_call.1} parent=1 // pred_check
      _
    $region3: #{tpu_custom_call.1} parent=1 // pred_check_branch
      %17 = sbr.rel (0) target = $region5
    $region4: #{tpu_custom_call.1} parent=1 // pred_region
      %s19 = ssub.s32 128, 128
      %20 = vsyncadd [#allocation3], %s19
      %s22 = sshll.u32 [#allocation2], 4
      %s23 = int_to_ptr.vmem [resolvable:$true] %s22
      %25 = dma.hbm_to_vmem [thread:$0]  %s0, 128, %s23, [#allocation3]
    $region5: #{tpu_custom_call.1} parent=1 // pred_fallthru
      _
    // Predicated region
    $region6: #{tpu_custom_call.1} parent=1 // pred_check
      _
    $region7: #{tpu_custom_call.1} parent=1 // pred_check_branch
      %27 = sbr.rel (0) target = $region9
    $region8: #{tpu_custom_call.1} parent=1 // pred_region
      %s29 = ssub.s32 1024, 1024
      %30 = vsyncadd [#allocation6], %s29
      %s31 = sshll.u32 [#allocation5], 4
      %s32 = int_to_ptr.vmem [resolvable:$true] %s31
      %37 = dma.hbm_to_vmem [thread:$0]  %s1, 1024, %s32, [#allocation6], 128, 128, 8
    $region9: #{tpu_custom_call.1} parent=1 // pred_fallthru
      _
    // Predicated region
    $region10: #{tpu_custom_call.1} parent=1 // pred_check
      _
    $region11: #{tpu_custom_call.1} parent=1 // pred_check_branch
      %39 = sbr.rel (0) target = $region13
    $region12: #{tpu_custom_call.1} parent=1 // pred_region
      _
    $region13: #{tpu_custom_call.1} parent=1 // pred_fallthru
      _
    // Predicated region
    $region14: #{tpu_custom_call.1} parent=1 // pred_check
      _
    $region15: #{tpu_custom_call.1} parent=1 // pred_check_branch
      %41 = sbr.rel (0) target = $region17
    $region16: #{tpu_custom_call.1} parent=1 // pred_region
      %s43 = ssub.s32 2048, 2048
      %44 = vsyncadd [#allocation6], %s43
      %s45 = sshll.u32 [#allocation7], 4
      %s46 = int_to_ptr.vmem [resolvable:$true] %s45
      %51 = dma.hbm_to_vmem [thread:$0]  %s3, 2048, %s46, [#allocation6], 128, 128, 8
    $region17: #{tpu_custom_call.1} parent=1 // pred_fallthru
      _
    // Predicated region
    $region18: #{tpu_custom_call.1} parent=1 // pred_check
      _
    $region19: #{tpu_custom_call.1} parent=1 // pred_check_branch
      %53 = sbr.rel (0) target = $region21
    $region20: #{tpu_custom_call.1} parent=1 // pred_region
      _
    $region21: #{tpu_custom_call.1} parent=1 // pred_fallthru
      _
    // Predicated region
    $region22: #{tpu_custom_call.1} parent=1 // pred_check
      _
    $region23: #{tpu_custom_call.1} parent=1 // pred_check_branch
      %55 = sbr.rel (0) target = $region25
    $region24: #{tpu_custom_call.1} parent=1 // pred_region
      %56 = dma.done [#allocation3], 128
    $region25: #{tpu_custom_call.1} parent=1 // pred_fallthru
      _
    // Predicated region
    $region26: #{tpu_custom_call.1} parent=1 // pred_check
      _
    $region27: #{tpu_custom_call.1} parent=1 // pred_check_branch
      %58 = sbr.rel (0) target = $region29
    $region28: #{tpu_custom_call.1} parent=1 // pred_region
      %59 = dma.done [#allocation6], 1024
    $region29: #{tpu_custom_call.1} parent=1 // pred_fallthru
      _
    // Predicated region
    $region30: #{tpu_custom_call.1} parent=1 // pred_check
      _
    $region31: #{tpu_custom_call.1} parent=1 // pred_check_branch
      %61 = sbr.rel (0) target = $region33
    $region32: #{tpu_custom_call.1} parent=1 // pred_region
      %62 = dma.done [#allocation6], 2048
    $region33: #{tpu_custom_call.1} parent=1 // pred_fallthru
      _
    %v63 = vld [vmem:[#allocation2] sm:$0xff]
    %v64 = vmax.f32 %v63, 0.0
    %v65 = vld [vmem:[#allocation5] sm:$0xff]
    %v66 = vld [vmem:[#allocation5 + $0x8] sm:$0xff]
    %v67 = vld [vmem:[#allocation5 + $0x10] sm:$0xff]
    %v68 = vld [vmem:[#allocation5 + $0x18] sm:$0xff]
    %v69 = vld [vmem:[#allocation5 + $0x20] sm:$0xff]
    %v70 = vld [vmem:[#allocation5 + $0x28] sm:$0xff]
    %v71 = vld [vmem:[#allocation5 + $0x30] sm:$0xff]
    %v72 = vld [vmem:[#allocation5 + $0x38] sm:$0xff]
    %v73 = vld [vmem:[%s2] sm:$0x1]
    %v75 = vlaneseq
    %v76 = vshrl.u32 %v75, 7
    %v77 = vsub.s32 0, %v76
    %v78 = vrot.slane %v73, %v77
    %vm80 = vcmask 523264
    %v82 = vsel %vm80, %v64, 0
    %84 = vmatprep.subr.mxu0 0.0
    %85 = vmatpush1.msra.mxu0 %v65
    %86 = vmatprep.subr.mxu0 0.0
    %87 = vmatpush1.msra.mxu0 %v66
    %88 = vmatprep.subr.mxu0 0.0
    %89 = vmatpush1.msra.mxu0 %v67
    %90 = vmatprep.subr.mxu0 0.0
    %91 = vmatpush1.msra.mxu0 %v68
    %92 = vmatprep.subr.mxu0 0.0
    %93 = vmatpush1.msra.mxu0 %v69
    %94 = vmatprep.subr.mxu0 0.0
    %95 = vmatpush1.msra.mxu0 %v70
    %96 = vmatprep.subr.mxu0 0.0
    %97 = vmatpush1.msra.mxu0 %v71
    %98 = vmatprep.subr.mxu0 0.0
    %99 = vmatpush1.msra.mxu0 %v72
    %100 = vmatprep.subr.mxu0 0.0
    %101 = vmatpush1.msra.mxu0 0.0
    %102 = vmatprep.subr.mxu0 0.0
    %103 = vmatpush1.msra.mxu0 0.0
    %104 = vmatprep.subr.mxu0 0.0
    %105 = vmatpush1.msra.mxu0 0.0
    %106 = vmatprep.subr.mxu0 0.0
    %107 = vmatpush1.msra.mxu0 0.0
    %108 = vmatprep.subr.mxu0 0.0
    %109 = vmatpush1.msra.mxu0 0.0
    %110 = vmatprep.subr.mxu0 0.0
    %111 = vmatpush1.msra.mxu0 0.0
    %112 = vmatprep.subr.mxu0 0.0
    %113 = vmatpush1.msra.mxu0 0.0
    %114 = vmatprep.subr.mxu0 0.0
    %115 = vmatpush1.msra.mxu0 0.0
    %116 = vmatprep.subr.mxu0 0.0
    %117 = vmatpush1.msra.mxu0 0.0
    %118 = vmatprep.subr.mxu0 0.0
    %119 = vmatpush1.msra.mxu0 0.0
    %120 = vmatprep.subr.mxu0 0.0
    %121 = vmatpush1.msra.mxu0 0.0
    %122 = vmatprep.subr.mxu0 0.0
    %123 = vmatpush1.msra.mxu0 0.0
    %124 = vmatprep.subr.mxu0 0.0
    %125 = vmatpush1.msra.mxu0 0.0
    %126 = vmatprep.subr.mxu0 0.0
    %127 = vmatpush1.msra.mxu0 0.0
    %128 = vmatprep.subr.mxu0 0.0
    %129 = vmatpush1.msra.mxu0 0.0
    %130 = vmatprep.subr.mxu0 0.0
    %131 = vmatpush1.msra.mxu0 0.0
    %132 = vmatprep.subr.mxu0 0.0
    %133 = vmatpush1.msra.mxu0 0.0
    %134 = vmatprep.subr.mxu0 0.0
    %135 = vmatpush1.msra.mxu0 0.0
    %136 = vmatprep.subr.mxu0 0.0
    %137 = vmatpush1.msra.mxu0 0.0
    %138 = vmatprep.subr.mxu0 0.0
    %139 = vmatpush1.msra.mxu0 0.0
    %140 = vmatprep.subr.mxu0 0.0
    %141 = vmatpush1.msra.mxu0 0.0
    %142 = vmatprep.subr.mxu0 0.0
    %143 = vmatpush1.msra.mxu0 0.0
    %144 = vmatprep.subr.mxu0 0.0
    %145 = vmatpush1.msra.mxu0 0.0
    %146 = vmatprep.subr.mxu0 0.0
    %147 = vmatpush1.msra.mxu0 0.0
    %148 = vmatprep.mubr.f32.mxu0 0.0
    %149 = vmatmul.mubr.f32.gmra.mrb[0].mxu0 %v82
    %v150 = vpop.f32.mrb[0].mxu0
    %v151 = vadd.f32 %v78, %v150
    %v152 = vpop.f32.mrb[0].mxu0
    %153 = vdwg.mxu0
    %154 = vst [vmem:[#allocation8] sm:$0xff] %v151
    %v155 = vmax.f32 %v151, 0.0
    %v156 = vld [vmem:[#allocation7] sm:$0xff]
    %v157 = vld [vmem:[#allocation7 + $0x8] sm:$0xff]
    %v158 = vld [vmem:[#allocation7 + $0x10] sm:$0xff]
    %v159 = vld [vmem:[#allocation7 + $0x18] sm:$0xff]
    %v160 = vld [vmem:[#allocation7 + $0x20] sm:$0xff]
    %v161 = vld [vmem:[#allocation7 + $0x28] sm:$0xff]
    %v162 = vld [vmem:[#allocation7 + $0x30] sm:$0xff]
    %v163 = vld [vmem:[#allocation7 + $0x38] sm:$0xff]
    %v164 = vld [vmem:[#allocation7 + $0x40] sm:$0xff]
    %v165 = vld [vmem:[#allocation7 + $0x48] sm:$0xff]
    %v166 = vld [vmem:[#allocation7 + $0x50] sm:$0xff]
    %v167 = vld [vmem:[#allocation7 + $0x58] sm:$0xff]
    %v168 = vld [vmem:[#allocation7 + $0x60] sm:$0xff]
    %v169 = vld [vmem:[#allocation7 + $0x68] sm:$0xff]
    %v170 = vld [vmem:[#allocation7 + $0x70] sm:$0xff]
    %v171 = vld [vmem:[#allocation7 + $0x78] sm:$0xff]
    %v172 = vld [vmem:[%s4] sm:$0x1]
    %v174 = vlaneseq
    %v175 = vshrl.u32 %v174, 7
    %v176 = vsub.s32 0, %v175
    %v177 = vrot.slane %v172, %v176
    %179 = vmatprep.subr.mxu0 0.0
    %180 = vmatpush1.msra.mxu0 %v156
    %181 = vmatprep.subr.mxu0 0.0
    %182 = vmatpush1.msra.mxu0 %v157
    %183 = vmatprep.subr.mxu0 0.0
    %184 = vmatpush1.msra.mxu0 %v158
    %185 = vmatprep.subr.mxu0 0.0
    %186 = vmatpush1.msra.mxu0 %v159
    %187 = vmatprep.subr.mxu0 0.0
    %188 = vmatpush1.msra.mxu0 %v160
    %189 = vmatprep.subr.mxu0 0.0
    %190 = vmatpush1.msra.mxu0 %v161
    %191 = vmatprep.subr.mxu0 0.0
    %192 = vmatpush1.msra.mxu0 %v162
    %193 = vmatprep.subr.mxu0 0.0
    %194 = vmatpush1.msra.mxu0 %v163
    %195 = vmatprep.subr.mxu0 0.0
    %196 = vmatpush1.msra.mxu0 %v164
    %197 = vmatprep.subr.mxu0 0.0
    %198 = vmatpush1.msra.mxu0 %v165
    %199 = vmatprep.subr.mxu0 0.0
    %200 = vmatpush1.msra.mxu0 %v166
    %201 = vmatprep.subr.mxu0 0.0
    %202 = vmatpush1.msra.mxu0 %v167
    %203 = vmatprep.subr.mxu0 0.0
    %204 = vmatpush1.msra.mxu0 %v168
    %205 = vmatprep.subr.mxu0 0.0
    %206 = vmatpush1.msra.mxu0 %v169
    %207 = vmatprep.subr.mxu0 0.0
    %208 = vmatpush1.msra.mxu0 %v170
    %209 = vmatprep.subr.mxu0 0.0
    %210 = vmatpush1.msra.mxu0 %v171
    %211 = vmatprep.subr.mxu0 0.0
    %212 = vmatpush1.msra.mxu0 0.0
    %213 = vmatprep.subr.mxu0 0.0
    %214 = vmatpush1.msra.mxu0 0.0
    %215 = vmatprep.subr.mxu0 0.0
    %216 = vmatpush1.msra.mxu0 0.0
    %217 = vmatprep.subr.mxu0 0.0
    %218 = vmatpush1.msra.mxu0 0.0
    %219 = vmatprep.subr.mxu0 0.0
    %220 = vmatpush1.msra.mxu0 0.0
    %221 = vmatprep.subr.mxu0 0.0
    %222 = vmatpush1.msra.mxu0 0.0
    %223 = vmatprep.subr.mxu0 0.0
    %224 = vmatpush1.msra.mxu0 0.0
    %225 = vmatprep.subr.mxu0 0.0
    %226 = vmatpush1.msra.mxu0 0.0
    %227 = vmatprep.subr.mxu0 0.0
    %228 = vmatpush1.msra.mxu0 0.0
    %229 = vmatprep.subr.mxu0 0.0
    %230 = vmatpush1.msra.mxu0 0.0
    %231 = vmatprep.subr.mxu0 0.0
    %232 = vmatpush1.msra.mxu0 0.0
    %233 = vmatprep.subr.mxu0 0.0
    %234 = vmatpush1.msra.mxu0 0.0
    %235 = vmatprep.subr.mxu0 0.0
    %236 = vmatpush1.msra.mxu0 0.0
    %237 = vmatprep.subr.mxu0 0.0
    %238 = vmatpush1.msra.mxu0 0.0
    %239 = vmatprep.subr.mxu0 0.0
    %240 = vmatpush1.msra.mxu0 0.0
    %241 = vmatprep.subr.mxu0 0.0
    %242 = vmatpush1.msra.mxu0 0.0
    %243 = vmatprep.mubr.f32.mxu0 0.0
    %244 = vmatmul.mubr.f32.gmra.mrb[0].mxu0 %v155
    %v245 = vpop.f32.mrb[0].mxu0
    %v246 = vadd.f32 %v177, %v245
    %v247 = vpop.f32.mrb[0].mxu0
    %248 = vdwg.mxu0
    %249 = vst [vmem:[#allocation9] sm:$0xff] %v246
    // Predicated region
    $region34: #{tpu_custom_call.1} parent=1 // pred_check
      _
    $region35: #{tpu_custom_call.1} parent=1 // pred_check_branch
      %251 = sbr.rel (0) target = $region37
    $region36: #{tpu_custom_call.1} parent=1 // pred_region
      %s253 = ssub.s32 128, 128
      %254 = vsyncadd [#allocation4], %s253
      %s256 = sshll.u32 [#allocation8], 4
      %s257 = int_to_ptr.vmem [resolvable:$true] %s256
      %259 = dma.vmem_to_hbm [thread:$0]  %s257, 128, %s5, [#allocation4]
    $region37: #{tpu_custom_call.1} parent=1 // pred_fallthru
      _
    // Predicated region
    $region38: #{tpu_custom_call.1} parent=1 // pred_check
      _
    $region39: #{tpu_custom_call.1} parent=1 // pred_check_branch
      %261 = sbr.rel (0) target = $region41
    $region40: #{tpu_custom_call.1} parent=1 // pred_region
      %s263 = ssub.s32 128, 128
      %264 = vsyncadd [#allocation10], %s263
      %s266 = sshll.u32 [#allocation9], 4
      %s267 = int_to_ptr.vmem [resolvable:$true] %s266
      %269 = dma.vmem_to_hbm [thread:$0]  %s267, 128, %s6, [#allocation10]
    $region41: #{tpu_custom_call.1} parent=1 // pred_fallthru
      _
    // Predicated region
    $region42: #{tpu_custom_call.1} parent=1 // pred_check
      _
    $region43: #{tpu_custom_call.1} parent=1 // pred_check_branch
      %271 = sbr.rel (0) target = $region45
    $region44: #{tpu_custom_call.1} parent=1 // pred_region
      %272 = dma.done [#allocation4], 128
    $region45: #{tpu_custom_call.1} parent=1 // pred_fallthru
      _
    // Predicated region
    $region46: #{tpu_custom_call.1} parent=1 // pred_check
      _
    $region47: #{tpu_custom_call.1} parent=1 // pred_check_branch
      %274 = sbr.rel (0) target = $region49
    $region48: #{tpu_custom_call.1} parent=1 // pred_region
      %275 = dma.done [#allocation10], 128
    $region49: #{tpu_custom_call.1} parent=1 // pred_fallthru
      _
    %276 = vsyncpa [#allocation3], 1
    %277 = vsyncpa [#allocation6], 1
    %278 = vsyncpa [#allocation4], 1
    %279 = vsyncpa [#allocation10], 1

</llo_original>
